<compile_context>
chip_gen: v7x
topology: tpu7x:2x2x1
jax: 0.10.0
libtpu: 0.0.40
codegen_flags: <defaults>
</compile_context>

<pallas_src>
import functools

import jax
import jax.numpy as jnp
from jax import lax
from jax.experimental import pallas as pl
from jax.experimental.pallas import tpu as pltpu

RANGE_MIN = 0.0
RANGE_MAX = 1.0

_TARGET_TILE_BYTES = 4 * 1024 * 1024      # per-row-tile DMA granularity
_LANE = 128


@functools.lru_cache(maxsize=None)
def _vmem_budget_bytes():
    """Per-generation scoped-VMEM budget: 3/4 of physical VMEM, leaving
    headroom for double buffers / compiler scratch (v5e/v6e ~96 MiB,
    v7x ~48 MiB).  Falls back to a conservative 48 MiB if the query fails."""
    cap = 64 * 1024 * 1024
    try:
        info = pltpu.get_tpu_info()
        cap = int(getattr(info, "vmem_capacity_bytes", cap)) or cap
    except Exception:
        pass
    return max(32 * 1024 * 1024, (cap * 3) // 4)


def _round_up(x, m):
    return (x + m - 1) // m * m


def _compute_scale_min(data_min, data_max):
    """sklearn-style scale_/min_ from per-feature min/max (float32)."""
    data_range = data_max - data_min
    eps = jnp.finfo(jnp.float32).eps
    # _handle_zeros_in_scale: ranges below 10*eps are treated as 1.0
    safe_range = jnp.where(data_range < 10.0 * eps,
                           jnp.ones_like(data_range), data_range)
    scale = (RANGE_MAX - RANGE_MIN) / safe_range
    min_ = RANGE_MIN - data_min * scale
    return scale, min_


# --------------------------------------------------------------------------
# Resident-X single-call kernel: grid = (2, num_tiles).
#   phase 0: read tile i, copy into resident VMEM scratch, accumulate min/max
#   phase 1: transform tile i from the scratch (no second HBM read of X)
# --------------------------------------------------------------------------
def _resident_kernel(x_ref, y_ref, scale_ref, min_ref, xres, mn, mx, *,
                     tile_n, n_rows, num_tiles, needs_mask):
    p = pl.program_id(0)
    i = pl.program_id(1)
    phase0 = p == 0
    last_i = num_tiles - 1
    acc_dt = mn.dtype
    pos = jnp.asarray(jnp.inf, dtype=acc_dt)
    neg = jnp.asarray(-jnp.inf, dtype=acc_dt)

    @pl.when(jnp.logical_and(phase0, i == 0))
    def _():
        mn[...] = jnp.full(mn.shape, jnp.inf, acc_dt)
        mx[...] = jnp.full(mx.shape, -jnp.inf, acc_dt)

    def _ingest(mask_tail):
        x = x_ref[...]
        xres[i] = x                                   # keep resident copy
        xa = x.astype(acc_dt)
        if mask_tail:
            row = last_i * tile_n + lax.broadcasted_iota(jnp.int32, xa.shape, 0)
            valid = row < n_rows
            x_lo = jnp.where(valid, xa, pos)
            x_hi = jnp.where(valid, xa, neg)
        else:
            x_lo = x_hi = xa
        mn[...] = jnp.minimum(mn[...], jnp.min(x_lo, axis=0, keepdims=True))
        mx[...] = jnp.maximum(mx[...], jnp.max(x_hi, axis=0, keepdims=True))

    if needs_mask:
        @pl.when(jnp.logical_and(phase0, i != last_i))
        def _():
            _ingest(False)

        @pl.when(jnp.logical_and(phase0, i == last_i))
        def _():
            _ingest(True)
    else:
        @pl.when(phase0)
        def _():
            _ingest(False)

    @pl.when(jnp.logical_and(phase0, i == last_i))
    def _():
        scale, min_ = _compute_scale_min(mn[...].astype(jnp.float32),
                                         mx[...].astype(jnp.float32))
        scale_ref[...] = scale
        min_ref[...] = min_

    @pl.when(p == 1)
    def _():
        xt = xres[i].astype(jnp.float32)
        y_ref[...] = (xt * scale_ref[...] + min_ref[...]).astype(y_ref.dtype)


# --------------------------------------------------------------------------
# Streaming pass 1: partial min/max per group, accumulated in the output
# blocks (dtype-native, no f32 tile temp).  Leading grid axis is "parallel"
# so v7x shards the reduce across both TensorCores.
# --------------------------------------------------------------------------
def _reduce_kernel(x_ref, min_ref, max_ref, *, tile_n, tiles_per_group,
                   num_tiles, n_rows, needs_mask):
    p = pl.program_id(0)
    i = pl.program_id(1)
    acc_dt = min_ref.dtype
    pos = jnp.asarray(jnp.inf, dtype=acc_dt)
    neg = jnp.asarray(-jnp.inf, dtype=acc_dt)
    last_tile = num_tiles - 1
    # Same clamping as the index_map (duplicate processing of the last tile
    # when num_tiles % P != 0 is harmless: min/max are idempotent).
    t = jnp.minimum(p * tiles_per_group + i, last_tile)

    @pl.when(i == 0)
    def _():
        min_ref[...] = jnp.full(min_ref.shape, jnp.inf, acc_dt)
        max_ref[...] = jnp.full(max_ref.shape, -jnp.inf, acc_dt)

    def _acc(mask_tail):
        x = x_ref[...].astype(acc_dt)
        if mask_tail:
            row = last_tile * tile_n + lax.broadcasted_iota(jnp.int32, x.shape, 0)
            valid = row < n_rows
            x_lo = jnp.where(valid, x, pos)
            x_hi = jnp.where(valid, x, neg)
        else:
            x_lo = x_hi = x
        min_ref[...] = jnp.minimum(min_ref[...],
                                   jnp.min(x_lo, axis=0, keepdims=True))
        max_ref[...] = jnp.maximum(max_ref[...],
                                   jnp.max(x_hi, axis=0, keepdims=True))

    if needs_mask:
        @pl.when(t != last_tile)
        def _():
            _acc(False)

        @pl.when(t == last_tile)
        def _():
            _acc(True)
    else:
        _acc(False)


# --------------------------------------------------------------------------
# Streaming pass 2: elementwise transform (scale/min blocks have a constant
# index map so they are DMA'd once, not per grid step).
# --------------------------------------------------------------------------
def _transform_kernel(scale_ref, min_ref, x_ref, y_ref):
    y_ref[...] = (x_ref[...].astype(jnp.float32) * scale_ref[...]
                  + min_ref[...]).astype(y_ref.dtype)


# --------------------------------------------------------------------------
# Wrapper.
# --------------------------------------------------------------------------
def normalizer_forward(x, *, force_streaming=False, tile_n=None):
    """Equivalent of Normalizer.forward(X, accumulate=True, batched=True) on a
    freshly-constructed Normalizer (first partial_fit), range=(0, 1),
    clip=False.

    x: (B, T, H, W).  Returns (y, scale_, min_) with y the same shape/dtype
    as x and scale_/min_ of per-feature shape (H, W) in float32.
    """
    B, T, H, W = x.shape
    N = B * T
    F = H * W
    itemsize = jnp.dtype(x.dtype).itemsize
    acc_dtype = x.dtype if jnp.issubdtype(x.dtype, jnp.floating) else jnp.float32
    budget = _vmem_budget_bytes()

    # Lane-dense feature axis: pad F to a multiple of 128 (avoids masked
    # partial stores on the output path).
    F_pad = max(_LANE, _round_up(F, _LANE))
    x2 = x.reshape(N, F)
    if F_pad != F:
        x2 = jnp.pad(x2, ((0, 0), (0, F_pad - F)))

    # dtype-aware sublane rounding: 8 rows f32, 16 bf16, 32 int8/fp8.
    sub = max(8, 32 // itemsize)
    row_bytes = F_pad * itemsize
    if tile_n is None:
        tile_n = (_TARGET_TILE_BYTES // row_bytes) // sub * sub
    tile_n = max(sub, (tile_n // sub) * sub)
    tile_n = min(tile_n, _round_up(N, sub))
    num_tiles = pl.cdiv(N, tile_n)
    needs_mask = (N % tile_n) != 0
    tile_bytes = tile_n * row_bytes

    # Live-VMEM accounting for the resident path: full-X scratch + 2x input
    # tile + 2x output tile (double buffering) + accumulators / scale / min.
    resident_bytes = num_tiles * tile_bytes
    working_bytes = 4 * tile_bytes + 8 * F_pad * 4 + (1 << 20)
    use_resident = (not force_streaming) and (
        resident_bytes + working_bytes <= budget)

    if use_resident:
        kern = functools.partial(_resident_kernel, tile_n=tile_n, n_rows=N,
                                 num_tiles=num_tiles, needs_mask=needs_mask)
        y2, scale2, min2 = pl.pallas_call(
            kern,
            out_shape=(
                jax.ShapeDtypeStruct((N, F_pad), x.dtype),
                jax.ShapeDtypeStruct((1, F_pad), jnp.float32),
                jax.ShapeDtypeStruct((1, F_pad), jnp.float32),
            ),
            grid=(2, num_tiles),
            in_specs=[pl.BlockSpec(
                (tile_n, F_pad),
                # phase 0: tile i; phase 1: stay on the last tile (no re-DMA).
                lambda p, i: (i + p * (num_tiles - 1 - i), 0))],
            out_specs=(
                pl.BlockSpec((tile_n, F_pad), lambda p, i: (i * p, 0)),
                pl.BlockSpec((1, F_pad), lambda p, i: (0, 0)),
                pl.BlockSpec((1, F_pad), lambda p, i: (0, 0)),
            ),
            scratch_shapes=[
                pltpu.VMEM((num_tiles, tile_n, F_pad), x.dtype),  # resident X
                pltpu.VMEM((1, F_pad), acc_dtype),                # running min
                pltpu.VMEM((1, F_pad), acc_dtype),                # running max
            ],
            compiler_params=pltpu.CompilerParams(
                dimension_semantics=("arbitrary", "arbitrary"),
                vmem_limit_bytes=budget),
        )(x2)
    else:
        # -------- pass 1: partial min/max, sharded over TCs --------
        P = 2 if num_tiles >= 2 else 1
        tpg = pl.cdiv(num_tiles, P)
        rk = functools.partial(_reduce_kernel, tile_n=tile_n,
                               tiles_per_group=tpg, num_tiles=num_tiles,
                               n_rows=N, needs_mask=needs_mask)
        min_parts, max_parts = pl.pallas_call(
            rk,
            out_shape=(
                jax.ShapeDtypeStruct((P, F_pad), acc_dtype),
                jax.ShapeDtypeStruct((P, F_pad), acc_dtype),
            ),
            grid=(P, tpg),
            in_specs=[pl.BlockSpec(
                (tile_n, F_pad),
                lambda p, i: (jnp.minimum(p * tpg + i, num_tiles - 1), 0))],
            out_specs=(
                pl.BlockSpec((1, F_pad), lambda p, i: (p, 0)),
                pl.BlockSpec((1, F_pad), lambda p, i: (p, 0)),
            ),
            compiler_params=pltpu.CompilerParams(
                dimension_semantics=("parallel", "arbitrary"),
                vmem_limit_bytes=budget),
        )(x2)
        data_min = jnp.min(min_parts.astype(jnp.float32), axis=0, keepdims=True)
        data_max = jnp.max(max_parts.astype(jnp.float32), axis=0, keepdims=True)
        scale2, min2 = _compute_scale_min(data_min, data_max)

        # -------- pass 2: elementwise transform, parallel over tiles --------
        y2 = pl.pallas_call(
            _transform_kernel,
            out_shape=jax.ShapeDtypeStruct((N, F_pad), x.dtype),
            grid=(num_tiles,),
            in_specs=[
                pl.BlockSpec((1, F_pad), lambda i: (0, 0)),       # scale_
                pl.BlockSpec((1, F_pad), lambda i: (0, 0)),       # min_
                pl.BlockSpec((tile_n, F_pad), lambda i: (i, 0)),  # x tile
            ],
            out_specs=pl.BlockSpec((tile_n, F_pad), lambda i: (i, 0)),
            compiler_params=pltpu.CompilerParams(
                dimension_semantics=("parallel",),
                vmem_limit_bytes=budget),
        )(scale2, min2, x2)

    if F_pad != F:
        y2 = y2[:, :F]
        scale2 = scale2[:, :F]
        min2 = min2[:, :F]
    return (y2.reshape(B, T, H, W),
            scale2.reshape(H, W).astype(jnp.float32),
            min2.reshape(H, W).astype(jnp.float32))


# --------------------------------------------------------------------------
# Pure-JAX reference.
# --------------------------------------------------------------------------
def _reference(x):
    B, T, H, W = x.shape
    xf = x.reshape(-1, H, W).astype(jnp.float32)
    data_min = jnp.min(xf, axis=0)
    data_max = jnp.max(xf, axis=0)
    data_range = data_max - data_min
    eps = jnp.finfo(jnp.float32).eps
    safe = jnp.where(data_range < 10.0 * eps, 1.0, data_range)
    scale = (RANGE_MAX - RANGE_MIN) / safe
    min_ = RANGE_MIN - data_min * scale
    y = (x.astype(jnp.float32) * scale + min_).astype(x.dtype)
    return y, scale, min_


if __name__ == "__main__":
    key = jax.random.PRNGKey(0)
    k1, k2, k3 = jax.random.split(key, 3)

    # Test 1: small (B, T, H, W) f32 input -> resident-X single-call path.
    x = jax.random.normal(k1, (2, 4, 16, 16), dtype=jnp.float32) * 3.0 + 1.0
    y, scale_, min_ = normalizer_forward(x)
    jax.block_until_ready(y)
    y_ref, s_ref, m_ref = _reference(x)
    assert jnp.allclose(y, y_ref, atol=1e-5, rtol=1e-5)
    assert jnp.allclose(scale_, s_ref, atol=1e-5, rtol=1e-5)
    assert jnp.allclose(min_, m_ref, atol=1e-5, rtol=1e-5)

    # Test 2: force the two-pass streaming path with a non-divisible row
    # count (N = 300, tile_n = 128 -> masked tail; P = 2 reduce groups with a
    # clamped duplicate last tile).
    x2 = jax.random.normal(k2, (3, 100, 16, 16), dtype=jnp.float32) * 2.0 - 0.5
    y2, s2, m2 = normalizer_forward(x2, force_streaming=True, tile_n=128)
    jax.block_until_ready(y2)
    y2_ref, s2_ref, m2_ref = _reference(x2)
    assert jnp.allclose(y2, y2_ref, atol=1e-5, rtol=1e-5)
    assert jnp.allclose(s2, s2_ref, atol=1e-5, rtol=1e-5)
    assert jnp.allclose(m2, m2_ref, atol=1e-5, rtol=1e-5)

    # Test 3: bf16 input with ragged feature axis (F = 120 -> padded to 128)
    # and a masked tail tile on the resident path (dtype-native min/max).
    x3 = (jax.random.normal(k3, (2, 5, 10, 12), dtype=jnp.float32) * 4.0
          ).astype(jnp.bfloat16)
    y3, s3, m3 = normalizer_forward(x3)
    jax.block_until_ready(y3)
    y3_ref, s3_ref, m3_ref = _reference(x3)
    assert jnp.allclose(y3.astype(jnp.float32), y3_ref.astype(jnp.float32),
                        atol=1e-2, rtol=1e-2)
    assert jnp.allclose(s3, s3_ref, atol=1e-4, rtol=1e-4)
    assert jnp.allclose(m3, m3_ref, atol=1e-4, rtol=1e-4)

    print("KERNEL_OK")
</pallas_src>

<mosaic_0001>
module attributes {stable_mosaic.version = 11 : i64} {
  func.func @_resident_kernel(%arg0: i32, %arg1: i32, %arg2: memref<8x256xf32, #tpu.memory_space<vmem>>, %arg3: memref<8x256xf32, #tpu.memory_space<vmem>>, %arg4: memref<1x256xf32, #tpu.memory_space<vmem>>, %arg5: memref<1x256xf32, #tpu.memory_space<vmem>>, %arg6: memref<1x8x256xf32, #tpu.memory_space<vmem>>, %arg7: memref<1x256xf32, #tpu.memory_space<vmem>>, %arg8: memref<1x256xf32, #tpu.memory_space<vmem>>) attributes {dimension_semantics = [#tpu.dimension_semantics<arbitrary>, #tpu.dimension_semantics<arbitrary>], iteration_bounds = array<i64: 2, 1>, scalar_prefetch = 0 : i64, scratch_operands = 3 : i64, tpu.core_type = #tpu.core_type<tc>, window_params = [{transform_indices = @transform_0, window_bounds = array<i64: 8, 256>}, {transform_indices = @transform_1, window_bounds = array<i64: 8, 256>}, {pipeline_mode = #tpu.pipeline_mode<synchronous>, transform_indices = @transform_2, window_bounds = array<i64: 1, 256>}, {pipeline_mode = #tpu.pipeline_mode<synchronous>, transform_indices = @transform_3, window_bounds = array<i64: 1, 256>}]} {
    %c0_i32 = arith.constant 0 : i32
    %0 = arith.cmpi eq, %arg0, %c0_i32 : i32
    %c0_i32_0 = arith.constant 0 : i32
    %1 = arith.cmpi eq, %arg1, %c0_i32_0 : i32
    %2 = arith.andi %0, %1 : i1
    %3 = arith.extui %2 : i1 to i32
    %c0_i32_1 = arith.constant 0 : i32
    %4 = arith.cmpi ne, %3, %c0_i32_1 : i32
    scf.if %4 {
      %cst = arith.constant 0x7F800000 : f32
      %14 = vector.broadcast %cst : f32 to vector<1x256xf32>
      %c0 = arith.constant 0 : index
      %c0_6 = arith.constant 0 : index
      %15 = vector.load %arg7[%c0, %c0_6] : memref<1x256xf32, #tpu.memory_space<vmem>>, vector<1x256xf32>
      tpu.vector_store %arg7[%c0, %c0_6], %14 {strides = array<i32>} : memref<1x256xf32, #tpu.memory_space<vmem>>, vector<1x256xf32>,
      %cst_7 = arith.constant 0xFF800000 : f32
      %16 = vector.broadcast %cst_7 : f32 to vector<1x256xf32>
      %c0_8 = arith.constant 0 : index
      %c0_9 = arith.constant 0 : index
      %17 = vector.load %arg8[%c0_8, %c0_9] : memref<1x256xf32, #tpu.memory_space<vmem>>, vector<1x256xf32>
      tpu.vector_store %arg8[%c0_8, %c0_9], %16 {strides = array<i32>} : memref<1x256xf32, #tpu.memory_space<vmem>>, vector<1x256xf32>,
    } else {
    }
    %5 = arith.extui %0 : i1 to i32
    %c0_i32_2 = arith.constant 0 : i32
    %6 = arith.cmpi ne, %5, %c0_i32_2 : i32
    scf.if %6 {
      %c0 = arith.constant 0 : index
      %c0_6 = arith.constant 0 : index
      %14 = vector.load %arg2[%c0, %c0_6] : memref<8x256xf32, #tpu.memory_space<vmem>>, vector<8x256xf32>
      %15 = arith.index_cast %arg1 : i32 to index
      %c0_7 = arith.constant 0 : index
      %c0_8 = arith.constant 0 : index
      %16 = vector.load %arg6[%15, %c0_7, %c0_8] : memref<1x8x256xf32, #tpu.memory_space<vmem>>, vector<1x8x256xf32>
      %17 = vector.shape_cast %16 : vector<1x8x256xf32> to vector<8x256xf32>
      %18 = vector.shape_cast %14 : vector<8x256xf32> to vector<1x8x256xf32>
      tpu.vector_store %arg6[%15, %c0_7, %c0_8], %18 {strides = array<i32>} : memref<1x8x256xf32, #tpu.memory_space<vmem>>, vector<1x8x256xf32>,
      %c0_9 = arith.constant 0 : index
      %c0_10 = arith.constant 0 : index
      %19 = vector.load %arg7[%c0_9, %c0_10] : memref<1x256xf32, #tpu.memory_space<vmem>>, vector<1x256xf32>
      %cst = arith.constant dense<0x7F800000> : vector<256xf32>
      %20 = vector.multi_reduction <minimumf>, %14, %cst [0] : vector<8x256xf32> to vector<256xf32>
      %21 = vector.shape_cast %20 : vector<256xf32> to vector<1x256xf32>
      %22 = arith.minimumf %19, %21 : vector<1x256xf32>
      %c0_11 = arith.constant 0 : index
      %c0_12 = arith.constant 0 : index
      %23 = vector.load %arg7[%c0_11, %c0_12] : memref<1x256xf32, #tpu.memory_space<vmem>>, vector<1x256xf32>
      tpu.vector_store %arg7[%c0_11, %c0_12], %22 {strides = array<i32>} : memref<1x256xf32, #tpu.memory_space<vmem>>, vector<1x256xf32>,
      %c0_13 = arith.constant 0 : index
      %c0_14 = arith.constant 0 : index
      %24 = vector.load %arg8[%c0_13, %c0_14] : memref<1x256xf32, #tpu.memory_space<vmem>>, vector<1x256xf32>
      %cst_15 = arith.constant dense<0xFF800000> : vector<256xf32>
      %25 = vector.multi_reduction <maximumf>, %14, %cst_15 [0] : vector<8x256xf32> to vector<256xf32>
      %26 = vector.shape_cast %25 : vector<256xf32> to vector<1x256xf32>
      %27 = arith.maximumf %24, %26 : vector<1x256xf32>
      %c0_16 = arith.constant 0 : index
      %c0_17 = arith.constant 0 : index
      %28 = vector.load %arg8[%c0_16, %c0_17] : memref<1x256xf32, #tpu.memory_space<vmem>>, vector<1x256xf32>
      tpu.vector_store %arg8[%c0_16, %c0_17], %27 {strides = array<i32>} : memref<1x256xf32, #tpu.memory_space<vmem>>, vector<1x256xf32>,
    } else {
    }
    %c0_i32_3 = arith.constant 0 : i32
    %7 = arith.cmpi eq, %arg1, %c0_i32_3 : i32
    %8 = arith.andi %0, %7 : i1
    %9 = arith.extui %8 : i1 to i32
    %c0_i32_4 = arith.constant 0 : i32
    %10 = arith.cmpi ne, %9, %c0_i32_4 : i32
    scf.if %10 {
      %c0 = arith.constant 0 : index
      %c0_6 = arith.constant 0 : index
      %14 = vector.load %arg7[%c0, %c0_6] : memref<1x256xf32, #tpu.memory_space<vmem>>, vector<1x256xf32>
      %c0_7 = arith.constant 0 : index
      %c0_8 = arith.constant 0 : index
      %15 = vector.load %arg8[%c0_7, %c0_8] : memref<1x256xf32, #tpu.memory_space<vmem>>, vector<1x256xf32>
      %16 = arith.subf %15, %14 : vector<1x256xf32>
      %cst = arith.constant 1.1920929E-6 : f32
      %17 = vector.broadcast %cst : f32 to vector<1x256xf32>
      %18 = arith.cmpf olt, %16, %17 : vector<1x256xf32>
      %cst_9 = arith.constant 1.000000e+00 : f32
      %19 = vector.broadcast %cst_9 : f32 to vector<1x256xf32>
      %20 = arith.select %18, %19, %16 : vector<1x256xi1>, vector<1x256xf32>
      %cst_10 = arith.constant 1.000000e+00 : f32
      %21 = vector.broadcast %cst_10 : f32 to vector<1x256xf32>
      %22 = arith.divf %21, %20 : vector<1x256xf32>
      %23 = arith.mulf %14, %22 : vector<1x256xf32>
      %cst_11 = arith.constant 0.000000e+00 : f32
      %24 = vector.broadcast %cst_11 : f32 to vector<1x256xf32>
      %25 = arith.subf %24, %23 : vector<1x256xf32>
      %c0_12 = arith.constant 0 : index
      %c0_13 = arith.constant 0 : index
      %26 = vector.load %arg4[%c0_12, %c0_13] : memref<1x256xf32, #tpu.memory_space<vmem>>, vector<1x256xf32>
      tpu.vector_store %arg4[%c0_12, %c0_13], %22 {strides = array<i32>} : memref<1x256xf32, #tpu.memory_space<vmem>>, vector<1x256xf32>,
      %c0_14 = arith.constant 0 : index
      %c0_15 = arith.constant 0 : index
      %27 = vector.load %arg5[%c0_14, %c0_15] : memref<1x256xf32, #tpu.memory_space<vmem>>, vector<1x256xf32>
      tpu.vector_store %arg5[%c0_14, %c0_15], %25 {strides = array<i32>} : memref<1x256xf32, #tpu.memory_space<vmem>>, vector<1x256xf32>,
    } else {
    }
    %c1_i32 = arith.constant 1 : i32
    %11 = arith.cmpi eq, %arg0, %c1_i32 : i32
    %12 = arith.extui %11 : i1 to i32
    %c0_i32_5 = arith.constant 0 : i32
    %13 = arith.cmpi ne, %12, %c0_i32_5 : i32
    scf.if %13 {
      %14 = arith.index_cast %arg1 : i32 to index
      %c0 = arith.constant 0 : index
      %c0_6 = arith.constant 0 : index
      %15 = vector.load %arg6[%14, %c0, %c0_6] : memref<1x8x256xf32, #tpu.memory_space<vmem>>, vector<1x8x256xf32>
      %16 = vector.shape_cast %15 : vector<1x8x256xf32> to vector<8x256xf32>
      %c0_7 = arith.constant 0 : index
      %c0_8 = arith.constant 0 : index
      %17 = vector.load %arg4[%c0_7, %c0_8] : memref<1x256xf32, #tpu.memory_space<vmem>>, vector<1x256xf32>
      %18 = vector.broadcast %17 : vector<1x256xf32> to vector<8x256xf32>
      %19 = arith.mulf %16, %18 : vector<8x256xf32>
      %c0_9 = arith.constant 0 : index
      %c0_10 = arith.constant 0 : index
      %20 = vector.load %arg5[%c0_9, %c0_10] : memref<1x256xf32, #tpu.memory_space<vmem>>, vector<1x256xf32>
      %21 = vector.broadcast %20 : vector<1x256xf32> to vector<8x256xf32>
      %22 = arith.addf %19, %21 : vector<8x256xf32>
      %c0_11 = arith.constant 0 : index
      %c0_12 = arith.constant 0 : index
      %23 = vector.load %arg3[%c0_11, %c0_12] : memref<8x256xf32, #tpu.memory_space<vmem>>, vector<8x256xf32>
      tpu.vector_store %arg3[%c0_11, %c0_12], %22 {strides = array<i32>} : memref<8x256xf32, #tpu.memory_space<vmem>>, vector<8x256xf32>,
    } else {
    }
    return
  }
  func.func @transform_0(%arg0: i32, %arg1: i32) -> (i32, i32) {
    %c0_i32 = arith.constant 0 : i32
    %0 = arith.subi %c0_i32, %arg1 : i32
    %1 = arith.muli %arg0, %0 : i32
    %2 = arith.addi %arg1, %1 : i32
    %c0_i32_0 = arith.constant 0 : i32
    %c0_i32_1 = arith.constant 0 : i32
    return %2, %c0_i32_0 : i32, i32
  }
  func.func @transform_1(%arg0: i32, %arg1: i32) -> (i32, i32) {
    %0 = arith.muli %arg1, %arg0 : i32
    %c0_i32 = arith.constant 0 : i32
    %c0_i32_0 = arith.constant 0 : i32
    return %0, %c0_i32 : i32, i32
  }
  func.func @transform_2(%arg0: i32, %arg1: i32) -> (i32, i32) {
    %c0_i32 = arith.constant 0 : i32
    %c0_i32_0 = arith.constant 0 : i32
    %c0_i32_1 = arith.constant 0 : i32
    return %c0_i32, %c0_i32_0 : i32, i32
  }
  func.func @transform_3(%arg0: i32, %arg1: i32) -> (i32, i32) {
    %c0_i32 = arith.constant 0 : i32
    %c0_i32_0 = arith.constant 0 : i32
    %c0_i32_1 = arith.constant 0 : i32
    return %c0_i32, %c0_i32_0 : i32, i32
  }
}

</mosaic_0001>

<llo_original>
// kernel: tpu_custom_call.1
$region0: #{tpu_custom_call.1}
  #allocation0 [shape = 'u32[]', space=smem, size = 0x4, offset = 0x4, fixed_abs, tag = 'smem constant byte address 0x4 - core index']
  #allocation1 [shape = 'u32[144,128]{1,0:T(1,128)}', space=vmem, size = 0x12000, scoped, tag = 'internal scratch']
  #allocation2 [shape = 'f32[1,8,256]{2,1,0:T(8,128)}', space=vmem, size = 0x2000, scoped, tag = 'scratch operand']
  #allocation3 [shape = 'f32[1,256]{1,0:T(1,128)}', space=vmem, size = 0x400, scoped, tag = 'scratch operand']
  #allocation4 [shape = 'f32[1,256]{1,0:T(1,128)}', space=vmem, size = 0x400, scoped, tag = 'scratch operand']
  %s0 = inlined_call_operand.hbm [shape: f32[8,256], index: 0, kind: input, shape index: {}]
  %s1 = inlined_call_operand.hbm [shape: f32[8,256], index: 1, kind: output, shape index: {0}]
  %s2 = inlined_call_operand.hbm [shape: f32[1,256], index: 2, kind: output, shape index: {1}]
  %s3 = inlined_call_operand.hbm [shape: f32[1,256], index: 3, kind: output, shape index: {2}]
  %4 = xla_tuple %s1, %s2, %s3
  %s5 = sld [smem:[#allocation0]]
  $region73: #{tpu_custom_call.1} parent=0
    _
  %s7 = ssub.s32 1, %s5
  %s8 = scalar_select 0, %s7, %s5
  $region1: #{tpu_custom_call.1} parent=0
    #allocation5 [shape = 'u8[16384]{0}', space=vmem, size = 0x4000, scoped, tag = 'input window, operand 0']
    #allocation6 [shape = 's32[2]{0}', space=sflag, size = 0x8, scoped, tag = 'scoped memory for tpu_custom_call.1']
    #allocation7 [shape = 's32[2]{0}', space=sflag, size = 0x8, scoped, tag = 'scoped memory for tpu_custom_call.1']
    #allocation8 [shape = 'u8[16384]{0}', space=vmem, size = 0x4000, scoped, tag = 'output window, operand 0']
    #allocation9 [shape = 'u8[1024]{0}', space=vmem, size = 0x400, scoped, tag = 'output window, operand 1, single buffered']
    #allocation10 [shape = 's32[1]{0}', space=sflag, size = 0x4, scoped, tag = 'scoped memory for tpu_custom_call.1']
    #allocation11 [shape = 'u8[1024]{0}', space=vmem, size = 0x400, scoped, tag = 'output window, operand 2, single buffered']
    %9 = vsyncpa [#allocation6], 0
    %s10 = scalar_lea.sflag [#allocation6], 1
    %11 = vsyncpa %s10, 0
    %12 = vsyncpa [#allocation7], 0
    %s13 = scalar_lea.sflag [#allocation7], 1
    %14 = vsyncpa %s13, 0
    %15 = vsyncpa [#allocation10], 0
    loop: start=0, step=1, limit=4
    $region2: #{tpu_custom_call.1} parent=1 // loop_pre_header
      _
    $region3: #{tpu_custom_call.1} parent=1 // loop_header
      %s17 = sphi 0, %s21
      %p18 = scmp.ge.s32.totalorder %s17, 4
      %s24 = sphi 0, %s36
      %s25 = sphi 0, %s32
      %s26 = sphi 0, %s24
      %s27 = sphi 0, %s25
      %s28 = sphi 0, %s26
      %s29 = sphi 0, %s27
      %s45 = sphi 0, %s47
      %s48 = sphi 0, %s45
      %s49 = sphi 0, %s48
      %s65 = sphi 0, %s49
      %s73 = sphi 0, %s75
      %s76 = sphi 0, %s73
      %s77 = sphi 0, %s76
      %s93 = sphi 0, %s77
      %s97 = sphi 0, %s97
      %s99 = sphi 0, %s97
      %s100 = sphi 0, %s99
      %s114 = sphi 0, %s100
      %s118 = sphi 0, %s118
      %s120 = sphi 0, %s118
      %s121 = sphi 0, %s120
      %s135 = sphi 0, %s121
    $region4: #{tpu_custom_call.1} parent=1 // loop_header_branch
      %20 = sbr.rel (%p18) target = $region8
    $region5: #{tpu_custom_call.1} parent=1 // loop_body
      %s22 = ssub.s32 %s17, 1
      %s23 = ssub.s32 %s17, 2
      %s30 = sadd.s32 1, %s25
      %p31 = scmp.ge.s32.totalorder %s30, 1
      %s32 = scalar_select %p31, 0, %s30
      %s33 = sadd.s32 1, %s24
      %s34 = scalar_select %p31, %s33, %s24
      %p35 = scmp.ge.s32.totalorder %s34, 2
      %s36 = scalar_select %p35, 0, %s34
      %s37 = ssub.s32 0, %s25
      %s38 = smul.u32 %s24, %s37
      %s39 = sadd.s32 %s25, %s38
      %s40 = ssub.s32 0, %s32
      %s41 = smul.u32 %s36, %s40
      %s42 = sadd.s32 %s32, %s41
      %s43 = ssub.s32 %s39, %s42
      %p44 = scmp.eq.s32.totalorder %s43, 0
      %s46 = sadd.s32 %s45, 1
      %s47 = scalar_select %p44, %s45, %s46
      %p50 = pneg %p44
      %p51 = scmp.eq.s32.totalorder %s17, 1
      %p52 = por %p50, %p51
      %p53 = scmp.ne.s32.totalorder %s45, %s48
      %p54 = scmp.eq.s32.totalorder %s17, 0
      %p55 = por %p53, %p54
      %p56 = scmp.ne.s32.totalorder %s45, %s48
      %p57 = scmp.eq.s32.totalorder %s22, 1
      %p58 = por %p56, %p57
      %p59 = scmp.ne.s32.totalorder %s48, %s49
      %p60 = scmp.eq.s32.totalorder %s22, 0
      %p61 = por %p59, %p60
      %p62 = scmp.ne.s32.totalorder %s48, %s49
      %p63 = scmp.eq.s32.totalorder %s23, 1
      %p64 = por %p62, %p63
      %p66 = scmp.ne.s32.totalorder %s49, %s65
      %p67 = scmp.eq.s32.totalorder %s23, 0
      %p68 = por %p66, %p67
      %s69 = smul.u32 %s25, %s24
      %s70 = smul.u32 %s32, %s36
      %s71 = ssub.s32 %s69, %s70
      %p72 = scmp.eq.s32.totalorder %s71, 0
      %s74 = sadd.s32 %s73, 1
      %s75 = scalar_select %p72, %s73, %s74
      %p78 = pneg %p72
      %p79 = scmp.eq.s32.totalorder %s17, 1
      %p80 = por %p78, %p79
      %p81 = scmp.ne.s32.totalorder %s73, %s76
      %p82 = scmp.eq.s32.totalorder %s17, 0
      %p83 = por %p81, %p82
      %p84 = scmp.ne.s32.totalorder %s73, %s76
      %p85 = scmp.eq.s32.totalorder %s22, 1
      %p86 = por %p84, %p85
      %p87 = scmp.ne.s32.totalorder %s76, %s77
      %p88 = scmp.eq.s32.totalorder %s22, 0
      %p89 = por %p87, %p88
      %p90 = scmp.ne.s32.totalorder %s76, %s77
      %p91 = scmp.eq.s32.totalorder %s23, 1
      %p92 = por %p90, %p91
      %p94 = scmp.ne.s32.totalorder %s77, %s93
      %p95 = scmp.eq.s32.totalorder %s23, 0
      %p96 = por %p94, %p95
      %s98 = sadd.s32 %s97, 1
      %p101 = scmp.eq.s32.totalorder %s17, 1
      %p102 = scmp.ne.s32.totalorder %s97, %s99
      %p103 = scmp.eq.s32.totalorder %s17, 0
      %p104 = por %p102, %p103
      %p105 = scmp.ne.s32.totalorder %s97, %s99
      %p106 = scmp.eq.s32.totalorder %s22, 1
      %p107 = por %p105, %p106
      %p108 = scmp.ne.s32.totalorder %s99, %s100
      %p109 = scmp.eq.s32.totalorder %s22, 0
      %p110 = por %p108, %p109
      %p111 = scmp.ne.s32.totalorder %s99, %s100
      %p112 = scmp.eq.s32.totalorder %s23, 1
      %p113 = por %p111, %p112
      %p115 = scmp.ne.s32.totalorder %s100, %s114
      %p116 = scmp.eq.s32.totalorder %s23, 0
      %p117 = por %p115, %p116
      %s119 = sadd.s32 %s118, 1
      %p122 = scmp.eq.s32.totalorder %s17, 1
      %p123 = scmp.ne.s32.totalorder %s118, %s120
      %p124 = scmp.eq.s32.totalorder %s17, 0
      %p125 = por %p123, %p124
      %p126 = scmp.ne.s32.totalorder %s118, %s120
      %p127 = scmp.eq.s32.totalorder %s22, 1
      %p128 = por %p126, %p127
      %p129 = scmp.ne.s32.totalorder %s120, %s121
      %p130 = scmp.eq.s32.totalorder %s22, 0
      %p131 = por %p129, %p130
      %p132 = scmp.ne.s32.totalorder %s120, %s121
      %p133 = scmp.eq.s32.totalorder %s23, 1
      %p134 = por %p132, %p133
      %p136 = scmp.ne.s32.totalorder %s121, %s135
      %p137 = scmp.eq.s32.totalorder %s23, 0
      %p138 = por %p136, %p137
      %p139 = scmp.le.s32.totalorder 1, %s17
      %p140 = scmp.lt.s32.totalorder %s17, 3
      %p141 = pnand %p139, %p140
      %p142 = pneg %p141
      // Predicated region
      $region9: #{tpu_custom_call.1} parent=5 // pred_check
        _
      $region10: #{tpu_custom_call.1} parent=5 // pred_check_branch
        %144 = sbr.rel (%p141) target = $region12
      $region11: #{tpu_custom_call.1} parent=5 // pred_region
        %s145 = ssub.s32 %s17, 1
      $region12: #{tpu_custom_call.1} parent=5 // pred_fallthru
        _
      %p146 = scmp.lt.s32.totalorder %s17, 2
      // Predicated region
      $region13: #{tpu_custom_call.1} parent=5 // pred_check
        %p147 = pneg %p146
      $region14: #{tpu_custom_call.1} parent=5 // pred_check_branch
        %149 = sbr.rel (%p147) target = $region16
      $region15: #{tpu_custom_call.1} parent=5 // pred_region
        // Predicated region
        $region17: #{tpu_custom_call.1} parent=15 // pred_check
          %p150 = pneg %p55
        $region18: #{tpu_custom_call.1} parent=15 // pred_check_branch
          %152 = sbr.rel (%p150) target = $region20
        $region19: #{tpu_custom_call.1} parent=15 // pred_region
          %s153 = sand.u32 %s45, 1
          %s154 = scalar_lea.sflag [#allocation6], %s153
          %s155 = sand.u32 %s45, 1
          %s156 = smul.addr %s155, 16
          %s157 = scalar_lea.vmem [#allocation5], %s156
          %s158 = ssub.s32 0, %s25
          %s159 = smul.u32 %s24, %s158
          %s160 = sadd.s32 %s25, %s159
          %s162 = ssub.s32 256, 256
          %163 = vsyncadd %s154, %s162
          %s164 = smul.addr %s160, 2
          %s165 = smul.addr %s164, 128
          %s166 = scalar_lea.hbm %s0, %s165
          %s168 = sshll.u32 %s157, 4
          %s169 = int_to_ptr.vmem [resolvable:$true] %s168
          %171 = dma.hbm_to_vmem [thread:$0]  %s166, 256, %s169, %s154
        $region20: #{tpu_custom_call.1} parent=15 // pred_fallthru
          _
      $region16: #{tpu_custom_call.1} parent=5 // pred_fallthru
        _
      %p172 = scmp.le.s32.totalorder 1, %s17
      %p173 = scmp.lt.s32.totalorder %s17, 3
      %p174 = pnand %p172, %p173
      %p175 = pneg %p174
      // Predicated region
      $region21: #{tpu_custom_call.1} parent=5 // pred_check
        _
      $region22: #{tpu_custom_call.1} parent=5 // pred_check_branch
        %177 = sbr.rel (%p174) target = $region24
      $region23: #{tpu_custom_call.1} parent=5 // pred_region
        %s178 = ssub.s32 %s17, 1
        %s179 = sand.u32 %s48, 1
        %s180 = scalar_lea.sflag [#allocation6], %s179
        %s181 = sand.u32 %s48, 1
        %s182 = smul.addr %s181, 16
        %s183 = scalar_lea.vmem [#allocation5], %s182
        // Predicated region
        $region25: #{tpu_custom_call.1} parent=23 // pred_check
          %p184 = pneg %p61
        $region26: #{tpu_custom_call.1} parent=23 // pred_check_branch
          %186 = sbr.rel (%p184) target = $region28
        $region27: #{tpu_custom_call.1} parent=23 // pred_region
          %187 = dma.done %s180, 256
        $region28: #{tpu_custom_call.1} parent=23 // pred_fallthru
          _
        %s188 = sand.u32 %s48, 1
        %s189 = scalar_lea.sflag [#allocation6], %s188
        %s190 = sand.u32 %s48, 1
        %s191 = smul.addr %s190, 16
        %s192 = scalar_lea.vmem [#allocation5], %s191
        %p193 = pneg %p61
        %p194 = pneg %p58
        %p195 = pneg %p89
        %p196 = pneg %p86
        %s197 = sand.u32 %s76, 1
        %s198 = scalar_lea.sflag [#allocation7], %s197
        %s199 = sand.u32 %s76, 1
        %s200 = smul.addr %s199, 16
        %s201 = scalar_lea.vmem [#allocation8], %s200
        %p202 = pneg %p110
        %p203 = pneg %p107
        %p204 = pneg %p131
        %p205 = pneg %p128
        %s206 = ssub.s32 0, %s27
        %s207 = smul.u32 %s26, %s206
        %s208 = sadd.s32 %s27, %s207
        %s209 = smul.u32 %s27, %s26
        %p210 = scmp.eq.s32.totalorder %s26, 0
        %p211 = scmp.eq.s32.totalorder %s27, 0
        %p212 = pnand %p210, %p211
        %p213 = pneg %p212
        // Predicated region
        $region29: #{tpu_custom_call.1} parent=23 // pred_check
          _
        $region30: #{tpu_custom_call.1} parent=23 // pred_check_branch
          %215 = sbr.rel (%p212) target = $region32
        $region31: #{tpu_custom_call.1} parent=23 // pred_region
          %v216 = vlaneseq
          %vm217 = vcmp.ge.s32.totalorder %v216, 0
          %vm218 = vcmp.lt.s32.totalorder %v216, 256
          %vm219 = vmand %vm217, %vm218
          %220 = vst.msk [vmem:[#allocation3] sm:$0x3] %vm219, inf
          %221 = vst.msk [vmem:[#allocation4] sm:$0x3] %vm219, -inf
        $region32: #{tpu_custom_call.1} parent=23 // pred_fallthru
          _
        // Predicated region
        $region33: #{tpu_custom_call.1} parent=23 // pred_check
          %p222 = pneg %p210
        $region34: #{tpu_custom_call.1} parent=23 // pred_check_branch
          %224 = sbr.rel (%p222) target = $region36
        $region35: #{tpu_custom_call.1} parent=23 // pred_region
          %v225 = vld [vmem:[%s183] sm:$0xff]
          %v226 = vld [vmem:[%s183 + $0x8] sm:$0xff]
          %s227 = smul.u32 %s27, 2
          %s228 = smul.addr %s227, 8
          %s229 = scalar_lea.vmem [#allocation2], %s228
          %230 = vst [vmem:[%s229] sm:$0xff] %v225
          %231 = vst [vmem:[%s229 + $0x8] sm:$0xff] %v226
          %v232 = vld [vmem:[#allocation3] sm:$0x3]
          %v233 = vrot.slane %v225, 4
          %v234 = vmin.f32 %v225, %v233
          %v235 = vrot.slane %v234, 2
          %v236 = vmin.f32 %v234, %v235
          %v237 = vrot.slane %v236, 1
          %v238 = vmin.f32 %v236, %v237
          %v239 = vrot.slane %v226, 4
          %v240 = vmin.f32 %v226, %v239
          %v241 = vrot.slane %v240, 2
          %v242 = vmin.f32 %v240, %v241
          %v243 = vrot.slane %v242, 1
          %v244 = vmin.f32 %v242, %v243
          %v247 = vcombine.low %v238, %v244
          %v249 = vunpack.c.l.s4 1966171168
          %v250 = vunpack.c.0.s8 %v249
          %v251 = vlaneseq
          %v252 = vshrl.u32 %v251, 7
          %v253 = vsub.s32 %v250, %v252
          %v254 = vrot.slane %v247, %v253
          %v256 = vunpack.c.l.s4 1966171168
          %v257 = vunpack.c.0.s8 %v256
          %v258 = vlaneseq
          %v259 = vshrl.u32 %v258, 7
          %v260 = vsub.s32 %v257, %v259
          %v261 = vrot.slane %v254, %v260
          %v263 = vmin.f32 %v232, %v261
          %v264 = vlaneseq
          %vm265 = vcmp.ge.s32.totalorder %v264, 0
          %vm266 = vcmp.lt.s32.totalorder %v264, 256
          %vm267 = vmand %vm265, %vm266
          %268 = vst.msk [vmem:[#allocation3] sm:$0x3] %vm267, %v263
          %v269 = vld [vmem:[#allocation4] sm:$0x3]
          %v270 = vrot.slane %v225, 4
          %v271 = vmax.f32 %v225, %v270
          %v272 = vrot.slane %v271, 2
          %v273 = vmax.f32 %v271, %v272
          %v274 = vrot.slane %v273, 1
          %v275 = vmax.f32 %v273, %v274
          %v276 = vrot.slane %v226, 4
          %v277 = vmax.f32 %v226, %v276
          %v278 = vrot.slane %v277, 2
          %v279 = vmax.f32 %v277, %v278
          %v280 = vrot.slane %v279, 1
          %v281 = vmax.f32 %v279, %v280
          %v284 = vcombine.low %v275, %v281
          %v286 = vunpack.c.l.s4 1966171168
          %v287 = vunpack.c.0.s8 %v286
          %v288 = vlaneseq
          %v289 = vshrl.u32 %v288, 7
          %v290 = vsub.s32 %v287, %v289
          %v291 = vrot.slane %v284, %v290
          %v293 = vunpack.c.l.s4 1966171168
          %v294 = vunpack.c.0.s8 %v293
          %v295 = vlaneseq
          %v296 = vshrl.u32 %v295, 7
          %v297 = vsub.s32 %v294, %v296
          %v298 = vrot.slane %v291, %v297
          %v300 = vmax.f32 %v269, %v298
          %301 = vst.msk [vmem:[#allocation4] sm:$0x3] %vm267, %v300
        $region36: #{tpu_custom_call.1} parent=23 // pred_fallthru
          _
        // Predicated region
        $region37: #{tpu_custom_call.1} parent=23 // pred_check
          _
        $region38: #{tpu_custom_call.1} parent=23 // pred_check_branch
          %303 = sbr.rel (%p212) target = $region40
        $region39: #{tpu_custom_call.1} parent=23 // pred_region
          %v304 = vld [vmem:[#allocation3] sm:$0x3]
          %v305 = vld [vmem:[#allocation4] sm:$0x3]
          %v306 = vsub.f32 %v305, %v304
          %vm307 = vcmp.lt.f32.partialorder %v306, 1.1920929e-06
          %v308 = vsel %vm307, 1.0, %v306
          %v309 = vrcp.pop %v308
          %v310 = vmul.f32 1.0, %v309
          %v311 = vmul.f32 %v304, %v310
          %v312 = vsub.f32 0.0, %v311
          %v313 = vlaneseq
          %vm314 = vcmp.ge.s32.totalorder %v313, 0
          %vm315 = vcmp.lt.s32.totalorder %v313, 256
          %vm316 = vmand %vm314, %vm315
          %317 = vst.msk [vmem:[#allocation9] sm:$0x3] %vm316, %v310
          %318 = vst.msk [vmem:[#allocation11] sm:$0x3] %vm316, %v312
        $region40: #{tpu_custom_call.1} parent=23 // pred_fallthru
          _
        %p319 = scmp.eq.s32.totalorder %s26, 1
        // Predicated region
        $region41: #{tpu_custom_call.1} parent=23 // pred_check
          %p320 = pneg %p319
        $region42: #{tpu_custom_call.1} parent=23 // pred_check_branch
          %322 = sbr.rel (%p320) target = $region44
        $region43: #{tpu_custom_call.1} parent=23 // pred_region
          %s323 = smul.u32 %s27, 2
          %s324 = smul.addr %s323, 8
          %s325 = scalar_lea.vmem [#allocation2], %s324
          %v326 = vld [vmem:[%s325] sm:$0xff]
          %v327 = vld [vmem:[%s325 + $0x8] sm:$0xff]
          %v328 = vld [vmem:[#allocation9] sm:$0x3]
          %v330 = vlaneseq
          %v331 = vshrl.u32 %v330, 7
          %v332 = vsub.s32 0, %v331
          %v333 = vrot.slane %v328, %v332
          %v334 = vlaneseq
          %v335 = vshrl.u32 %v334, 7
          %v336 = vsub.s32 1, %v335
          %v337 = vrot.slane %v328, %v336
          %v340 = vmul.f32 %v326, %v333
          %v341 = vmul.f32 %v327, %v337
          %v342 = vld [vmem:[#allocation11] sm:$0x3]
          %v344 = vlaneseq
          %v345 = vshrl.u32 %v344, 7
          %v346 = vsub.s32 0, %v345
          %v347 = vrot.slane %v342, %v346
          %v348 = vlaneseq
          %v349 = vshrl.u32 %v348, 7
          %v350 = vsub.s32 1, %v349
          %v351 = vrot.slane %v342, %v350
          %v354 = vadd.f32 %v340, %v347
          %v355 = vadd.f32 %v341, %v351
          %356 = vst [vmem:[%s201] sm:$0xff] %v354
          %357 = vst [vmem:[%s201 + $0x8] sm:$0xff] %v355
        $region44: #{tpu_custom_call.1} parent=23 // pred_fallthru
          _
        %s358 = sand.u32 %s76, 1
        %s359 = scalar_lea.sflag [#allocation7], %s358
        %s360 = sand.u32 %s76, 1
        %s361 = smul.addr %s360, 16
        %s362 = scalar_lea.vmem [#allocation8], %s361
        // Predicated region
        $region45: #{tpu_custom_call.1} parent=23 // pred_check
          %p363 = pneg %p86
        $region46: #{tpu_custom_call.1} parent=23 // pred_check_branch
          %365 = sbr.rel (%p363) target = $region48
        $region47: #{tpu_custom_call.1} parent=23 // pred_region
          %s366 = smul.u32 %s27, %s26
          %s368 = ssub.s32 256, 256
          %369 = vsyncadd %s359, %s368
          %s370 = smul.addr %s366, 2
          %s371 = smul.addr %s370, 128
          %s372 = scalar_lea.hbm %s1, %s371
          %s374 = sshll.u32 %s362, 4
          %s375 = int_to_ptr.vmem [resolvable:$true] %s374
          %377 = dma.vmem_to_hbm [thread:$0]  %s375, 256, %s372, %s359
        $region48: #{tpu_custom_call.1} parent=23 // pred_fallthru
          _
        // Predicated region
        $region49: #{tpu_custom_call.1} parent=23 // pred_check
          %p378 = pneg %p107
        $region50: #{tpu_custom_call.1} parent=23 // pred_check_branch
          %380 = sbr.rel (%p378) target = $region52
        $region51: #{tpu_custom_call.1} parent=23 // pred_region
          %s382 = ssub.s32 32, 32
          %383 = vsyncadd [#allocation10], %s382
          %s385 = sshll.u32 [#allocation9], 4
          %s386 = int_to_ptr.vmem [resolvable:$true] %s385
          %388 = dma.vmem_to_hbm [thread:$0]  %s386, 32, %s2, [#allocation10]
        $region52: #{tpu_custom_call.1} parent=23 // pred_fallthru
          _
        // Predicated region
        $region53: #{tpu_custom_call.1} parent=23 // pred_check
          %p389 = pneg %p128
        $region54: #{tpu_custom_call.1} parent=23 // pred_check_branch
          %391 = sbr.rel (%p389) target = $region56
        $region55: #{tpu_custom_call.1} parent=23 // pred_region
          %s393 = ssub.s32 32, 32
          %394 = vsyncadd [#allocation10], %s393
          %s396 = sshll.u32 [#allocation11], 4
          %s397 = int_to_ptr.vmem [resolvable:$true] %s396
          %399 = dma.vmem_to_hbm [thread:$0]  %s397, 32, %s3, [#allocation10]
        $region56: #{tpu_custom_call.1} parent=23 // pred_fallthru
          _
        // Predicated region
        $region57: #{tpu_custom_call.1} parent=23 // pred_check
          %p400 = pneg %p107
        $region58: #{tpu_custom_call.1} parent=23 // pred_check_branch
          %402 = sbr.rel (%p400) target = $region60
        $region59: #{tpu_custom_call.1} parent=23 // pred_region
          %403 = dma.done [#allocation10], 32
        $region60: #{tpu_custom_call.1} parent=23 // pred_fallthru
          _
        // Predicated region
        $region61: #{tpu_custom_call.1} parent=23 // pred_check
          %p404 = pneg %p128
        $region62: #{tpu_custom_call.1} parent=23 // pred_check_branch
          %406 = sbr.rel (%p404) target = $region64
        $region63: #{tpu_custom_call.1} parent=23 // pred_region
          %407 = dma.done [#allocation10], 32
        $region64: #{tpu_custom_call.1} parent=23 // pred_fallthru
          _
      $region24: #{tpu_custom_call.1} parent=5 // pred_fallthru
        _
      %p408 = scmp.le.s32.totalorder 2, %s17
      // Predicated region
      $region65: #{tpu_custom_call.1} parent=5 // pred_check
        %p409 = pneg %p408
      $region66: #{tpu_custom_call.1} parent=5 // pred_check_branch
        %411 = sbr.rel (%p409) target = $region68
      $region67: #{tpu_custom_call.1} parent=5 // pred_region
        %s412 = ssub.s32 %s17, 2
        // Predicated region
        $region69: #{tpu_custom_call.1} parent=67 // pred_check
          %p413 = pneg %p92
        $region70: #{tpu_custom_call.1} parent=67 // pred_check_branch
          %415 = sbr.rel (%p413) target = $region72
        $region71: #{tpu_custom_call.1} parent=67 // pred_region
          %s416 = sand.u32 %s77, 1
          %s417 = scalar_lea.sflag [#allocation7], %s416
          %s418 = sand.u32 %s77, 1
          %s419 = smul.addr %s418, 16
          %s420 = scalar_lea.vmem [#allocation8], %s419
          %421 = dma.done %s417, 256
        $region72: #{tpu_custom_call.1} parent=67 // pred_fallthru
          _
      $region68: #{tpu_custom_call.1} parent=5 // pred_fallthru
        _
    $region6: #{tpu_custom_call.1} parent=1 // loop_footer
      %s21 = sadd.s32 1, %s17
    $region7: #{tpu_custom_call.1} parent=1 // loop_footer_branch
      %16 = sbr.rel target = $region3
    $region8: #{tpu_custom_call.1} parent=1 // loop_exit
      _
    %422 = vsyncpa [#allocation6], 1
    %s423 = scalar_lea.sflag [#allocation6], 1
    %424 = vsyncpa %s423, 1
    %425 = vsyncpa [#allocation7], 1
    %s426 = scalar_lea.sflag [#allocation7], 1
    %427 = vsyncpa %s426, 1
    %428 = vsyncpa [#allocation10], 1

</llo_original>
